<compile_context>
chip_gen: v7x
topology: tpu7x:2x2x1
jax: 0.10.0
libtpu: 0.0.40
codegen_flags: <defaults>
</compile_context>

<pallas_src>
import jax
import jax.numpy as jnp
from jax.experimental import pallas as pl
from jax.experimental.pallas import tpu as pltpu


def _chomp_kernel(x_ref, o_ref):
    # Output time-block size (static).  In the tiled path the input block has
    # the same time extent, so this is an identity (full) slice; in the
    # small-T fallback path the input block carries the whole T axis and the
    # static slice trims the chomped tail.  Pure VMEM copy, no compute units.
    t_out_blk = o_ref.shape[2]
    o_ref[...] = x_ref[:, :, :t_out_blk, :]


def chomp_t(x, t):
    """Pallas equivalent of `x[:, :, 0:-t, :]` for a 4D (N, C, T, F) tensor."""
    N, C, T, F = x.shape
    if not (0 < t < T):
        raise ValueError(f"chomp size t={t} must satisfy 0 < t < T={T}")
    T_out = T - t

    itemsize = jnp.dtype(x.dtype).itemsize

    # --- tile selection -----------------------------------------------------
    # Time tile: keep it a multiple of 8 (sublane) so the BlockSpec tiling
    # constraint is met even when T_out does not divide evenly (Pallas masks
    # the partial last block on the output).  If T_out < 8 we fall back to
    # reading the full T axis per block and slicing in-kernel.
    if T_out >= 8:
        t_tile = min(512, (T_out // 8) * 8)
        in_t_block = t_tile

        def _t_in_idx(ti):
            return ti
    else:
        t_tile = T_out          # equals full output T dim -> allowed
        in_t_block = T          # equals full input T dim  -> allowed

        def _t_in_idx(ti):
            return 0

    # Channel tile: grow each block toward ~4 MiB so the ~0.35 us/step
    # pipeline overhead is amortized, while 2 arrays x 2 pipeline buffers
    # (~16 MiB) stay well inside the 32 MiB scoped-VMEM default on every
    # generation (v5e/v6e/v7x).
    target_bytes = 4 * 1024 * 1024
    c_tile = max(1, min(C, target_bytes // max(1, in_t_block * F * itemsize)))

    grid = (N, pl.cdiv(C, c_tile), pl.cdiv(T_out, t_tile))

    in_spec = pl.BlockSpec(
        (1, c_tile, in_t_block, F),
        lambda n, c, ti: (n, c, _t_in_idx(ti), 0),
    )
    out_spec = pl.BlockSpec(
        (1, c_tile, t_tile, F),
        lambda n, c, ti: (n, c, ti, 0),
    )

    return pl.pallas_call(
        _chomp_kernel,
        out_shape=jax.ShapeDtypeStruct((N, C, T_out, F), x.dtype),
        grid=grid,
        in_specs=[in_spec],
        out_specs=out_spec,
        compiler_params=pltpu.CompilerParams(
            # Every grid axis produces independent output blocks -> all
            # parallel.  Shards across the 2 TensorCores on v7x; no-op on
            # v5e/v6e (1 TC), so safe unconditionally.
            dimension_semantics=("parallel", "parallel", "parallel"),
        ),
    )(x)


if __name__ == "__main__":
    key = jax.random.PRNGKey(0)

    # Small shapes consistent with the module's (N, C, T, F) convention.
    # F = 128 keeps the output lane-dense (unmasked vector stores).
    N, C, T, F = 2, 4, 16, 128
    t = 2

    x = jax.random.normal(key, (N, C, T, F), dtype=jnp.float32)

    y = chomp_t(x, t)
    y = jax.block_until_ready(y)

    ref = x[:, :, : T - t, :]
    assert y.shape == (N, C, T - t, F), y.shape
    assert y.dtype == x.dtype
    if not bool(jnp.allclose(y, ref)):
        raise SystemExit("Chomp_T Pallas kernel does not match reference slice")

    print("KERNEL_OK")
</pallas_src>

<mosaic_0001>
module attributes {stable_mosaic.version = 11 : i64} {
  func.func @_chomp_kernel(%arg0: i32, %arg1: i32, %arg2: i32, %arg3: memref<1x4x8x128xf32, #tpu.memory_space<vmem>>, %arg4: memref<1x4x8x128xf32, #tpu.memory_space<vmem>>) attributes {dimension_semantics = [#tpu.dimension_semantics<parallel>, #tpu.dimension_semantics<parallel>, #tpu.dimension_semantics<parallel>], iteration_bounds = array<i64: 2, 1, 2>, scalar_prefetch = 0 : i64, scratch_operands = 0 : i64, tpu.core_type = #tpu.core_type<tc>, window_params = [{transform_indices = @transform_0, window_bounds = array<i64: 1, 4, 8, 128>}, {transform_indices = @transform_1, window_bounds = array<i64: 1, 4, 8, 128>}]} {
    %c0 = arith.constant 0 : index
    %c0_0 = arith.constant 0 : index
    %c0_1 = arith.constant 0 : index
    %c0_2 = arith.constant 0 : index
    %0 = vector.load %arg3[%c0, %c0_0, %c0_1, %c0_2] : memref<1x4x8x128xf32, #tpu.memory_space<vmem>>, vector<1x4x8x128xf32>
    %c0_3 = arith.constant 0 : index
    %c0_4 = arith.constant 0 : index
    %c0_5 = arith.constant 0 : index
    %c0_6 = arith.constant 0 : index
    %1 = vector.load %arg4[%c0_3, %c0_4, %c0_5, %c0_6] : memref<1x4x8x128xf32, #tpu.memory_space<vmem>>, vector<1x4x8x128xf32>
    tpu.vector_store %arg4[%c0_3, %c0_4, %c0_5, %c0_6], %0 {strides = array<i32>} : memref<1x4x8x128xf32, #tpu.memory_space<vmem>>, vector<1x4x8x128xf32>,
    return
  }
  func.func @transform_0(%arg0: i32, %arg1: i32, %arg2: i32) -> (i32, i32, i32, i32) {
    %c0_i32 = arith.constant 0 : i32
    %c0_i32_0 = arith.constant 0 : i32
    return %arg0, %arg1, %arg2, %c0_i32 : i32, i32, i32, i32
  }
  func.func @transform_1(%arg0: i32, %arg1: i32, %arg2: i32) -> (i32, i32, i32, i32) {
    %c0_i32 = arith.constant 0 : i32
    %c0_i32_0 = arith.constant 0 : i32
    return %arg0, %arg1, %arg2, %c0_i32 : i32, i32, i32, i32
  }
}

</mosaic_0001>

<llo_original>
// kernel: tpu_custom_call.1
$region0: #{tpu_custom_call.1}
  #allocation0 [shape = 'u32[]', space=smem, size = 0x4, offset = 0x4, fixed_abs, tag = 'smem constant byte address 0x4 - core index']
  #allocation1 [shape = 'u32[144,128]{1,0:T(1,128)}', space=vmem, size = 0x12000, scoped, tag = 'internal scratch']
  %s0 = inlined_call_operand.hbm [shape: f32[2,4,16,128], index: 0, kind: input, shape index: {}]
  %s1 = inlined_call_operand.vmem [shape: f32[2,4,14,128], index: 1, kind: output, shape index: {}]
  %s2 = sld [smem:[#allocation0]]
  $region75: #{tpu_custom_call.1} parent=0
    _
  %s4 = ssub.s32 1, %s2
  %s5 = scalar_select 0, %s4, %s2
  $region1: #{tpu_custom_call.1} parent=0
    #allocation2 [shape = 'u8[32768]{0}', space=vmem, size = 0x8000, scoped, tag = 'input window, operand 0']
    #allocation3 [shape = 's32[2]{0}', space=sflag, size = 0x8, scoped, tag = 'scoped memory for tpu_custom_call.1']
    #allocation4 [shape = 'u8[32768]{0}', space=vmem, size = 0x8000, scoped, tag = 'output window, operand 0']
    %6 = vsyncpa [#allocation3], 0
    %s7 = scalar_lea.sflag [#allocation3], 1
    %8 = vsyncpa %s7, 0
    loop: start=0, step=1, limit=6
    $region2: #{tpu_custom_call.1} parent=1 // loop_pre_header
      _
    $region3: #{tpu_custom_call.1} parent=1 // loop_header
      %s10 = sphi 0, %s14
      %p11 = scmp.ge.s32.totalorder %s10, 6
      %s17 = sphi 0, %s36
      %s18 = sphi 0, %s32
      %s19 = sphi 0, %s28
      %s20 = sphi 0, %s17
      %s21 = sphi 0, %s18
      %s22 = sphi 0, %s19
      %s23 = sphi 0, %s20
      %s24 = sphi 0, %s21
      %s25 = sphi 0, %s22
      %s43 = sphi 0, %s45
      %s46 = sphi 0, %s43
      %s47 = sphi 0, %s46
      %s63 = sphi 0, %s47
      %s73 = sphi 0, %s75
      %s76 = sphi 0, %s73
      %s77 = sphi 0, %s76
      %s93 = sphi 0, %s77
    $region4: #{tpu_custom_call.1} parent=1 // loop_header_branch
      %13 = sbr.rel (%p11) target = $region8
    $region5: #{tpu_custom_call.1} parent=1 // loop_body
      %s15 = ssub.s32 %s10, 1
      %s16 = ssub.s32 %s10, 2
      %s26 = sadd.s32 1, %s19
      %p27 = scmp.ge.s32.totalorder %s26, 2
      %s28 = scalar_select %p27, 0, %s26
      %s29 = sadd.s32 1, %s18
      %s30 = scalar_select %p27, %s29, %s18
      %p31 = scmp.ge.s32.totalorder %s30, 1
      %s32 = scalar_select %p31, 0, %s30
      %s33 = sadd.s32 1, %s17
      %s34 = scalar_select %p31, %s33, %s17
      %p35 = scmp.ge.s32.totalorder %s34, 2
      %s36 = scalar_select %p35, 0, %s34
      %s37 = ssub.s32 %s17, %s36
      %s38 = ssub.s32 %s18, %s32
      %s39 = sor.u32 %s37, %s38
      %s40 = ssub.s32 %s19, %s28
      %s41 = sor.u32 %s39, %s40
      %p42 = scmp.eq.s32.totalorder %s41, 0
      %s44 = sadd.s32 %s43, 1
      %s45 = scalar_select %p42, %s43, %s44
      %p48 = pneg %p42
      %p49 = scmp.eq.s32.totalorder %s10, 3
      %p50 = por %p48, %p49
      %p51 = scmp.ne.s32.totalorder %s43, %s46
      %p52 = scmp.eq.s32.totalorder %s10, 0
      %p53 = por %p51, %p52
      %p54 = scmp.ne.s32.totalorder %s43, %s46
      %p55 = scmp.eq.s32.totalorder %s15, 3
      %p56 = por %p54, %p55
      %p57 = scmp.ne.s32.totalorder %s46, %s47
      %p58 = scmp.eq.s32.totalorder %s15, 0
      %p59 = por %p57, %p58
      %p60 = scmp.ne.s32.totalorder %s46, %s47
      %p61 = scmp.eq.s32.totalorder %s16, 3
      %p62 = por %p60, %p61
      %p64 = scmp.ne.s32.totalorder %s47, %s63
      %p65 = scmp.eq.s32.totalorder %s16, 0
      %p66 = por %p64, %p65
      %s67 = ssub.s32 %s17, %s36
      %s68 = ssub.s32 %s18, %s32
      %s69 = sor.u32 %s67, %s68
      %s70 = ssub.s32 %s19, %s28
      %s71 = sor.u32 %s69, %s70
      %p72 = scmp.eq.s32.totalorder %s71, 0
      %s74 = sadd.s32 %s73, 1
      %s75 = scalar_select %p72, %s73, %s74
      %p78 = pneg %p72
      %p79 = scmp.eq.s32.totalorder %s10, 3
      %p80 = por %p78, %p79
      %p81 = scmp.ne.s32.totalorder %s73, %s76
      %p82 = scmp.eq.s32.totalorder %s10, 0
      %p83 = por %p81, %p82
      %p84 = scmp.ne.s32.totalorder %s73, %s76
      %p85 = scmp.eq.s32.totalorder %s15, 3
      %p86 = por %p84, %p85
      %p87 = scmp.ne.s32.totalorder %s76, %s77
      %p88 = scmp.eq.s32.totalorder %s15, 0
      %p89 = por %p87, %p88
      %p90 = scmp.ne.s32.totalorder %s76, %s77
      %p91 = scmp.eq.s32.totalorder %s16, 3
      %p92 = por %p90, %p91
      %p94 = scmp.ne.s32.totalorder %s77, %s93
      %p95 = scmp.eq.s32.totalorder %s16, 0
      %p96 = por %p94, %p95
      %p97 = scmp.le.s32.totalorder 1, %s10
      %p98 = scmp.lt.s32.totalorder %s10, 5
      %p99 = pnand %p97, %p98
      %p100 = pneg %p99
      // Predicated region
      $region9: #{tpu_custom_call.1} parent=5 // pred_check
        _
      $region10: #{tpu_custom_call.1} parent=5 // pred_check_branch
        %102 = sbr.rel (%p99) target = $region12
      $region11: #{tpu_custom_call.1} parent=5 // pred_region
        %s103 = ssub.s32 %s10, 1
      $region12: #{tpu_custom_call.1} parent=5 // pred_fallthru
        _
      %p104 = scmp.lt.s32.totalorder %s10, 4
      // Predicated region
      $region13: #{tpu_custom_call.1} parent=5 // pred_check
        %p105 = pneg %p104
      $region14: #{tpu_custom_call.1} parent=5 // pred_check_branch
        %107 = sbr.rel (%p105) target = $region16
      $region15: #{tpu_custom_call.1} parent=5 // pred_region
        // Predicated region
        $region17: #{tpu_custom_call.1} parent=15 // pred_check
          %p108 = pneg %p53
        $region18: #{tpu_custom_call.1} parent=15 // pred_check_branch
          %110 = sbr.rel (%p108) target = $region20
        $region19: #{tpu_custom_call.1} parent=15 // pred_region
          %s111 = sand.u32 %s43, 1
          %s112 = scalar_lea.sflag [#allocation3], %s111
          %s113 = sand.u32 %s43, 1
          %s114 = smul.addr %s113, 32
          %s115 = scalar_lea.vmem [#allocation2], %s114
          %s116 = smul.u32 4, %s18
          %s118 = ssub.s32 512, 512
          %119 = vsyncadd %s112, %s118
          %s120 = smul.addr %s116, 2
          %s121 = sadd.s32 %s19, %s120
          %s122 = smul.addr %s17, 8
          %s123 = sadd.s32 %s121, %s122
          %s124 = smul.addr %s123, 128
          %s125 = scalar_lea.hbm %s0, %s124
          %s126 = sshll.u32 %s115, 4
          %s127 = int_to_ptr.vmem [resolvable:$true] %s126
          %132 = dma.hbm_to_vmem [thread:$0]  %s125, 512, %s127, %s112, 256, 128, 8
        $region20: #{tpu_custom_call.1} parent=15 // pred_fallthru
          _
      $region16: #{tpu_custom_call.1} parent=5 // pred_fallthru
        _
      %p133 = scmp.le.s32.totalorder 1, %s10
      %p134 = scmp.lt.s32.totalorder %s10, 5
      %p135 = pnand %p133, %p134
      %p136 = pneg %p135
      // Predicated region
      $region21: #{tpu_custom_call.1} parent=5 // pred_check
        _
      $region22: #{tpu_custom_call.1} parent=5 // pred_check_branch
        %138 = sbr.rel (%p135) target = $region24
      $region23: #{tpu_custom_call.1} parent=5 // pred_region
        %s139 = ssub.s32 %s10, 1
        %s140 = sand.u32 %s46, 1
        %s141 = scalar_lea.sflag [#allocation3], %s140
        %s142 = sand.u32 %s46, 1
        %s143 = smul.addr %s142, 32
        %s144 = scalar_lea.vmem [#allocation2], %s143
        // Predicated region
        $region25: #{tpu_custom_call.1} parent=23 // pred_check
          %p145 = pneg %p59
        $region26: #{tpu_custom_call.1} parent=23 // pred_check_branch
          %147 = sbr.rel (%p145) target = $region28
        $region27: #{tpu_custom_call.1} parent=23 // pred_region
          %148 = dma.done %s141, 512
        $region28: #{tpu_custom_call.1} parent=23 // pred_fallthru
          _
        %s149 = sand.u32 %s46, 1
        %s150 = scalar_lea.sflag [#allocation3], %s149
        %s151 = sand.u32 %s46, 1
        %s152 = smul.addr %s151, 32
        %s153 = scalar_lea.vmem [#allocation2], %s152
        %p154 = pneg %p59
        %p155 = pneg %p56
        %p156 = pneg %p89
        %p157 = pneg %p86
        %s158 = sand.u32 %s76, 1
        %s159 = sand.u32 %s76, 1
        %s160 = smul.addr %s159, 32
        %s161 = scalar_lea.vmem [#allocation4], %s160
        %s162 = smul.u32 4, %s21
        %s163 = smul.u32 4, %s21
        %v164 = vld [vmem:[%s144] sm:$0xff]
        %v165 = vld [vmem:[%s144 + $0x8] sm:$0xff]
        %v166 = vld [vmem:[%s144 + $0x10] sm:$0xff]
        %v167 = vld [vmem:[%s144 + $0x18] sm:$0xff]
        %168 = vst [vmem:[%s161] sm:$0xff] %v164
        %169 = vst [vmem:[%s161 + $0x8] sm:$0xff] %v165
        %170 = vst [vmem:[%s161 + $0x10] sm:$0xff] %v166
        %171 = vst [vmem:[%s161 + $0x18] sm:$0xff] %v167
        %s172 = sand.u32 %s76, 1
        %s173 = sand.u32 %s76, 1
        %s174 = smul.addr %s173, 32
        %s175 = scalar_lea.vmem [#allocation4], %s174
        // Predicated region
        $region29: #{tpu_custom_call.1} parent=23 // pred_check
          %p176 = pneg %p86
        $region30: #{tpu_custom_call.1} parent=23 // pred_check_branch
          %178 = sbr.rel (%p176) target = $region32
        $region31: #{tpu_custom_call.1} parent=23 // pred_region
          %s179 = smul.u32 4, %s21
          %s180 = smul.addr %s179, 2
          %s181 = sadd.s32 %s22, %s180
          %s182 = smul.addr %s20, 8
          %s183 = sadd.s32 %s181, %s182
          %s184 = smul.addr %s183, 8
          %s185 = scalar_lea.vmem %s1, %s184
          // Predicated region
          $region33: #{tpu_custom_call.1} parent=31 // pred_check
            _
          $region34: #{tpu_custom_call.1} parent=31 // pred_check_branch
            %187 = sbr.rel (0) target = $region36
          $region35: #{tpu_custom_call.1} parent=31 // pred_region
            // Predicated region
            $region37: #{tpu_custom_call.1} parent=35 // pred_check
              _
            $region38: #{tpu_custom_call.1} parent=35 // pred_check_branch
              %189 = sbr.rel (0) target = $region40
            $region39: #{tpu_custom_call.1} parent=35 // pred_region
              // Predicated region
              $region52: #{tpu_custom_call.1} parent=39 // pred_check
                _
              $region53: #{tpu_custom_call.1} parent=39 // pred_check_branch
                %210 = sbr.rel (0) target = $region55
              $region54: #{tpu_custom_call.1} parent=39 // pred_region
                loop: start=0, step=1, limit=1
                $region56: #{tpu_custom_call.1} parent=54 // loop_pre_header
                  _
                $region57: #{tpu_custom_call.1} parent=54 // loop_header
                  %s212 = sphi 0, %s216
                  %p213 = scmp.ge.s32.totalorder %s212, 1
                  %s217 = sphi %s175, %s175
                  %s218 = sphi %s185, %s185
                $region58: #{tpu_custom_call.1} parent=54 // loop_header_branch
                  %215 = sbr.rel (%p213) target = $region62
                $region59: #{tpu_custom_call.1} parent=54 // loop_body
                  %v219 = vld [vmem:[%s217] sm:$0xff]
                  %220 = vst [vmem:[%s218] sm:$0xff] %v219
                  %v221 = vld [vmem:[%s217 + $0x8] sm:$0xff]
                  %222 = vst [vmem:[%s218 + $0x10] sm:$0xff] %v221
                  %v223 = vld [vmem:[%s217 + $0x10] sm:$0xff]
                  %224 = vst [vmem:[%s218 + $0x20] sm:$0xff] %v223
                  %v225 = vld [vmem:[%s217 + $0x18] sm:$0xff]
                  %226 = vst [vmem:[%s218 + $0x30] sm:$0xff] %v225
                $region60: #{tpu_custom_call.1} parent=54 // loop_footer
                  %s216 = sadd.s32 1, %s212
                $region61: #{tpu_custom_call.1} parent=54 // loop_footer_branch
                  %211 = sbr.rel target = $region57
                $region62: #{tpu_custom_call.1} parent=54 // loop_exit
                  _
              $region55: #{tpu_custom_call.1} parent=39 // pred_fallthru
                _
              // Predicated region
              $region63: #{tpu_custom_call.1} parent=39 // pred_check
                _
              $region64: #{tpu_custom_call.1} parent=39 // pred_check_branch
                %228 = sbr.rel target = $region66
              $region65: #{tpu_custom_call.1} parent=39 // pred_region
                _
              $region66: #{tpu_custom_call.1} parent=39 // pred_fallthru
                _
            $region40: #{tpu_custom_call.1} parent=35 // pred_fallthru
              _
            // Predicated region
            $region41: #{tpu_custom_call.1} parent=35 // pred_check
              _
            $region42: #{tpu_custom_call.1} parent=35 // pred_check_branch
              %191 = sbr.rel target = $region44
            $region43: #{tpu_custom_call.1} parent=35 // pred_region
              loop: start=0, step=1, limit=1
              $region45: #{tpu_custom_call.1} parent=43 // loop_pre_header
                _
              $region46: #{tpu_custom_call.1} parent=43 // loop_header
                %s194 = sphi 0, %s198
                %p195 = scmp.ge.s32.totalorder %s194, 1
                %s199 = sphi %s175, %s175
                %s200 = sphi %s185, %s185
              $region47: #{tpu_custom_call.1} parent=43 // loop_header_branch
                %197 = sbr.rel (%p195) target = $region51
              $region48: #{tpu_custom_call.1} parent=43 // loop_body
                %v201 = vld [vmem:[%s199] sm:$0xff]
                %202 = vst [vmem:[%s200] sm:$0xff] %v201
                %v203 = vld [vmem:[%s199 + $0x8] sm:$0xff]
                %204 = vst [vmem:[%s200 + $0x10] sm:$0xff] %v203
                %v205 = vld [vmem:[%s199 + $0x10] sm:$0xff]
                %206 = vst [vmem:[%s200 + $0x20] sm:$0xff] %v205
                %v207 = vld [vmem:[%s199 + $0x18] sm:$0xff]
                %208 = vst [vmem:[%s200 + $0x30] sm:$0xff] %v207
              $region49: #{tpu_custom_call.1} parent=43 // loop_footer
                %s198 = sadd.s32 1, %s194
              $region50: #{tpu_custom_call.1} parent=43 // loop_footer_branch
                %193 = sbr.rel target = $region46
              $region51: #{tpu_custom_call.1} parent=43 // loop_exit
                _
            $region44: #{tpu_custom_call.1} parent=35 // pred_fallthru
              _
          $region36: #{tpu_custom_call.1} parent=31 // pred_fallthru
            _
          %229 = vnop
        $region32: #{tpu_custom_call.1} parent=23 // pred_fallthru
          _
      $region24: #{tpu_custom_call.1} parent=5 // pred_fallthru
        _
      %p230 = scmp.le.s32.totalorder 2, %s10
      // Predicated region
      $region67: #{tpu_custom_call.1} parent=5 // pred_check
        %p231 = pneg %p230
      $region68: #{tpu_custom_call.1} parent=5 // pred_check_branch
        %233 = sbr.rel (%p231) target = $region70
      $region69: #{tpu_custom_call.1} parent=5 // pred_region
        %s234 = ssub.s32 %s10, 2
        // Predicated region
        $region71: #{tpu_custom_call.1} parent=69 // pred_check
          %p235 = pneg %p92
        $region72: #{tpu_custom_call.1} parent=69 // pred_check_branch
          %237 = sbr.rel (%p235) target = $region74
        $region73: #{tpu_custom_call.1} parent=69 // pred_region
          %s238 = sand.u32 %s77, 1
          %s239 = sand.u32 %s77, 1
          %s240 = smul.addr %s239, 32
          %s241 = scalar_lea.vmem [#allocation4], %s240
        $region74: #{tpu_custom_call.1} parent=69 // pred_fallthru
          _
      $region70: #{tpu_custom_call.1} parent=5 // pred_fallthru
        _
    $region6: #{tpu_custom_call.1} parent=1 // loop_footer
      %s14 = sadd.s32 1, %s10
    $region7: #{tpu_custom_call.1} parent=1 // loop_footer_branch
      %9 = sbr.rel target = $region3
    $region8: #{tpu_custom_call.1} parent=1 // loop_exit
      _
    %242 = vsyncpa [#allocation3], 1
    %s243 = scalar_lea.sflag [#allocation3], 1
    %244 = vsyncpa %s243, 1

</llo_original>
